<compile_context>
chip_gen: v7x
topology: tpu7x:2x2x1
jax: 0.10.0
libtpu: 0.0.40
codegen_flags: <defaults>
</compile_context>

<pallas_src>
import functools
import math

import jax
import jax.numpy as jnp
from jax import lax
from jax.experimental import pallas as pl
from jax.experimental.pallas import tpu as pltpu

MEAN = 0.0
STD = 0.05


def _i32(x):
    """Python int -> int32 constant with unsigned-32 wraparound semantics."""
    x &= 0xFFFFFFFF
    if x >= 0x80000000:
        x -= 0x100000000
    return jnp.int32(x)


def _mix32(h):
    """lowbias32 finalizer: full-avalanche 32-bit hash using only VPU ops."""
    h = h ^ lax.shift_right_logical(h, 16)
    h = h * _i32(0x21F0AAAD)
    h = h ^ lax.shift_right_logical(h, 15)
    h = h * _i32(0x735A2D97)
    h = h ^ lax.shift_right_logical(h, 15)
    return h


def _bits_to_unit_float(bits):
    """Top 23 random bits -> f32 in [1, 2) via exponent trick (no converts)."""
    m = lax.shift_right_logical(bits, 9) | _i32(0x3F800000)
    return lax.bitcast_convert_type(m, jnp.float32)


def _gaussian_noise_kernel(seed_ref, x_ref, o_ref, *, mean, std):
    tile_r, lane_w = x_ref.shape
    half = tile_r // 2  # tile_r is a multiple of the sublane count -> even

    # Unique global counter per first-half element of this block; each counter
    # drives one Box-Muller pair: z1 for row r, z2 for row r + half.
    base = pl.program_id(0) * tile_r
    row = lax.broadcasted_iota(jnp.int32, (half, lane_w), 0)
    col = lax.broadcasted_iota(jnp.int32, (half, lane_w), 1)
    ctr = (base + row) * lane_w + col

    seed_g = seed_ref[0] * _i32(0x9E3779B9)  # scalar, hoisted
    b1 = _mix32(ctr + seed_g)
    b2 = _mix32(b1 + _i32(0x6A09E667))

    f1 = _bits_to_unit_float(b1)        # uniform in [1, 2)
    u2 = _bits_to_unit_float(b2) - 1.0  # uniform in [0, 1)

    # Box-Muller, both branches. 2 - f1 is uniform in (0, 1], so log is safe.
    r = jnp.sqrt(-2.0 * jnp.log(2.0 - f1))
    theta = (2.0 * math.pi) * u2
    z1 = r * jnp.cos(theta)
    z2 = r * jnp.sin(theta)

    x_lo = x_ref[0:half, :].astype(jnp.float32)
    x_hi = x_ref[half:, :].astype(jnp.float32)
    o_ref[0:half, :] = (x_lo + (mean + std * z1)).astype(o_ref.dtype)
    o_ref[half:, :] = (x_hi + (mean + std * z2)).astype(o_ref.dtype)


def _choose_layout(n, itemsize):
    """Pick (lane_width, padded_rows, tile_rows): lane-dense, ~0.5 MiB blocks."""
    sublane = 16 if itemsize == 2 else 8
    lane_w = 128
    for lw in (1024, 512, 256, 128):  # widest lane dim that needs no padding
        if n % (lw * sublane) == 0:
            lane_w = lw
            break
    rows = pl.cdiv(n, lane_w)
    rows = ((rows + sublane - 1) // sublane) * sublane
    # ~0.5 MiB (f32-equivalent) per block buffer, sublane aligned.
    target_rows = max(sublane, ((512 * 1024 // 4) // lane_w) // sublane * sublane)
    tile_r = min(rows, target_rows)
    rows_padded = ((rows + tile_r - 1) // tile_r) * tile_r
    return lane_w, rows_padded, tile_r


def gaussian_noise(x, seed, *, mean=MEAN, std=STD, training=True):
    """Pallas equivalent of GaussianNoise.forward (x: any-shaped float array)."""
    if not training:
        return x  # eval mode: identity, matches the PyTorch module

    orig_shape = x.shape
    dtype = x.dtype
    n = x.size
    itemsize = jnp.dtype(dtype).itemsize

    lane_w, rows_padded, tile_r = _choose_layout(n, itemsize)
    padded_n = rows_padded * lane_w
    num_blocks = rows_padded // tile_r

    x_flat = x.reshape(-1)
    if padded_n != n:  # typical conv feature maps hit the no-pad path
        x_flat = jnp.pad(x_flat, (0, padded_n - n))
    x2d = x_flat.reshape(rows_padded, lane_w)

    seed_arr = jnp.asarray([seed], dtype=jnp.int32)
    kernel = functools.partial(
        _gaussian_noise_kernel, mean=float(mean), std=float(std)
    )

    out2d = pl.pallas_call(
        kernel,
        out_shape=jax.ShapeDtypeStruct((rows_padded, lane_w), dtype),
        grid_spec=pltpu.PrefetchScalarGridSpec(
            num_scalar_prefetch=1,
            grid=(num_blocks,),
            in_specs=[pl.BlockSpec((tile_r, lane_w), lambda i, s: (i, 0))],
            out_specs=pl.BlockSpec((tile_r, lane_w), lambda i, s: (i, 0)),
        ),
        compiler_params=pltpu.CompilerParams(
            dimension_semantics=("parallel",),  # independent blocks; megacore OK
        ),
        cost_estimate=pl.CostEstimate(
            flops=30 * padded_n,
            transcendentals=2 * padded_n,
            bytes_accessed=2 * padded_n * itemsize,
        ),
    )(seed_arr, x2d)

    out_flat = out2d.reshape(-1)
    if padded_n != n:
        out_flat = out_flat[:n]
    return out_flat.reshape(orig_shape)


if __name__ == "__main__":
    key = jax.random.PRNGKey(0)
    # Small NCHW input consistent with a conv feature map.
    x = jax.random.normal(key, (2, 4, 16, 16), dtype=jnp.float32)

    # Training mode: x + N(0, 0.05) noise.
    y = gaussian_noise(x, seed=1234, mean=MEAN, std=STD, training=True)
    y = jax.block_until_ready(y)

    # Eval mode: identity.
    y_eval = gaussian_noise(x, seed=1234, training=False)
    y_eval = jax.block_until_ready(y_eval)

    assert y.shape == x.shape and y.dtype == x.dtype
    assert bool(jnp.all(y_eval == x))

    # Sanity: noise statistics roughly match N(mean, std).
    noise = y - x
    nm = float(jnp.mean(noise))
    ns = float(jnp.std(noise))
    assert abs(nm - MEAN) < 0.02, f"noise mean off: {nm}"
    assert abs(ns - STD) < 0.02, f"noise std off: {ns}"

    print("KERNEL_OK")
</pallas_src>

<mosaic_0001>
module attributes {stable_mosaic.version = 11 : i64} {
  func.func @_gaussian_noise_kernel(%arg0: i32, %arg1: memref<1xi32, #tpu.memory_space<smem>>, %arg2: memref<8x256xf32, #tpu.memory_space<vmem>>, %arg3: memref<8x256xf32, #tpu.memory_space<vmem>>) attributes {dimension_semantics = [#tpu.dimension_semantics<parallel>], iteration_bounds = array<i64: 1>, scalar_prefetch = 1 : i64, scratch_operands = 0 : i64, tpu.core_type = #tpu.core_type<tc>, window_params = [{transform_indices = @transform_0, window_bounds = array<i64: 8, 256>}, {transform_indices = @transform_1, window_bounds = array<i64: 8, 256>}]} {
    %c8_i32 = arith.constant 8 : i32
    %0 = arith.muli %arg0, %c8_i32 : i32
    %1 = tpu.iota {dimensions = array<i32: 0>} : vector<4x256xi32>
    %2 = tpu.iota {dimensions = array<i32: 1>} : vector<4x256xi32>
    %3 = vector.broadcast %0 : i32 to vector<4x256xi32>
    %4 = arith.addi %3, %1 : vector<4x256xi32>
    %c256_i32 = arith.constant 256 : i32
    %5 = vector.broadcast %c256_i32 : i32 to vector<4x256xi32>
    %6 = arith.muli %4, %5 : vector<4x256xi32>
    %7 = arith.addi %6, %2 : vector<4x256xi32>
    %c0 = arith.constant 0 : index
    %8 = memref.load %arg1[%c0] : memref<1xi32, #tpu.memory_space<smem>>
    %c-1640531527_i32 = arith.constant -1640531527 : i32
    %9 = arith.muli %8, %c-1640531527_i32 : i32
    %10 = vector.broadcast %9 : i32 to vector<4x256xi32>
    %11 = arith.addi %7, %10 : vector<4x256xi32>
    %c16_i32 = arith.constant 16 : i32
    %12 = vector.broadcast %c16_i32 : i32 to vector<4x256xi32>
    %13 = arith.shrui %11, %12 : vector<4x256xi32>
    %14 = arith.xori %11, %13 : vector<4x256xi32>
    %c569420461_i32 = arith.constant 569420461 : i32
    %15 = vector.broadcast %c569420461_i32 : i32 to vector<4x256xi32>
    %16 = arith.muli %14, %15 : vector<4x256xi32>
    %c15_i32 = arith.constant 15 : i32
    %17 = vector.broadcast %c15_i32 : i32 to vector<4x256xi32>
    %18 = arith.shrui %16, %17 : vector<4x256xi32>
    %19 = arith.xori %16, %18 : vector<4x256xi32>
    %c1935289751_i32 = arith.constant 1935289751 : i32
    %20 = vector.broadcast %c1935289751_i32 : i32 to vector<4x256xi32>
    %21 = arith.muli %19, %20 : vector<4x256xi32>
    %c15_i32_0 = arith.constant 15 : i32
    %22 = vector.broadcast %c15_i32_0 : i32 to vector<4x256xi32>
    %23 = arith.shrui %21, %22 : vector<4x256xi32>
    %24 = arith.xori %21, %23 : vector<4x256xi32>
    %c1779033703_i32 = arith.constant 1779033703 : i32
    %25 = vector.broadcast %c1779033703_i32 : i32 to vector<4x256xi32>
    %26 = arith.addi %24, %25 : vector<4x256xi32>
    %c16_i32_1 = arith.constant 16 : i32
    %27 = vector.broadcast %c16_i32_1 : i32 to vector<4x256xi32>
    %28 = arith.shrui %26, %27 : vector<4x256xi32>
    %29 = arith.xori %26, %28 : vector<4x256xi32>
    %c569420461_i32_2 = arith.constant 569420461 : i32
    %30 = vector.broadcast %c569420461_i32_2 : i32 to vector<4x256xi32>
    %31 = arith.muli %29, %30 : vector<4x256xi32>
    %c15_i32_3 = arith.constant 15 : i32
    %32 = vector.broadcast %c15_i32_3 : i32 to vector<4x256xi32>
    %33 = arith.shrui %31, %32 : vector<4x256xi32>
    %34 = arith.xori %31, %33 : vector<4x256xi32>
    %c1935289751_i32_4 = arith.constant 1935289751 : i32
    %35 = vector.broadcast %c1935289751_i32_4 : i32 to vector<4x256xi32>
    %36 = arith.muli %34, %35 : vector<4x256xi32>
    %c15_i32_5 = arith.constant 15 : i32
    %37 = vector.broadcast %c15_i32_5 : i32 to vector<4x256xi32>
    %38 = arith.shrui %36, %37 : vector<4x256xi32>
    %39 = arith.xori %36, %38 : vector<4x256xi32>
    %c9_i32 = arith.constant 9 : i32
    %40 = vector.broadcast %c9_i32 : i32 to vector<4x256xi32>
    %41 = arith.shrui %24, %40 : vector<4x256xi32>
    %c1065353216_i32 = arith.constant 1065353216 : i32
    %42 = vector.broadcast %c1065353216_i32 : i32 to vector<4x256xi32>
    %43 = arith.ori %41, %42 : vector<4x256xi32>
    %44 = tpu.bitcast %43 : vector<4x256xi32> -> vector<4x256xf32>
    %c9_i32_6 = arith.constant 9 : i32
    %45 = vector.broadcast %c9_i32_6 : i32 to vector<4x256xi32>
    %46 = arith.shrui %39, %45 : vector<4x256xi32>
    %c1065353216_i32_7 = arith.constant 1065353216 : i32
    %47 = vector.broadcast %c1065353216_i32_7 : i32 to vector<4x256xi32>
    %48 = arith.ori %46, %47 : vector<4x256xi32>
    %49 = tpu.bitcast %48 : vector<4x256xi32> -> vector<4x256xf32>
    %cst = arith.constant 1.000000e+00 : f32
    %50 = vector.broadcast %cst : f32 to vector<4x256xf32>
    %51 = arith.subf %49, %50 : vector<4x256xf32>
    %cst_8 = arith.constant 2.000000e+00 : f32
    %52 = vector.broadcast %cst_8 : f32 to vector<4x256xf32>
    %53 = arith.subf %52, %44 : vector<4x256xf32>
    %54 = math.log %53 : vector<4x256xf32>
    %cst_9 = arith.constant -2.000000e+00 : f32
    %55 = vector.broadcast %cst_9 : f32 to vector<4x256xf32>
    %56 = arith.mulf %55, %54 : vector<4x256xf32>
    %57 = math.sqrt %56 : vector<4x256xf32>
    %cst_10 = arith.constant 6.28318548 : f32
    %58 = vector.broadcast %cst_10 : f32 to vector<4x256xf32>
    %59 = arith.mulf %58, %51 : vector<4x256xf32>
    %60 = math.cos %59 : vector<4x256xf32>
    %61 = arith.mulf %57, %60 : vector<4x256xf32>
    %62 = math.sin %59 : vector<4x256xf32>
    %63 = arith.mulf %57, %62 : vector<4x256xf32>
    %c0_11 = arith.constant 0 : index
    %c0_12 = arith.constant 0 : index
    %64 = vector.load %arg2[%c0_11, %c0_12] : memref<8x256xf32, #tpu.memory_space<vmem>>, vector<4x256xf32>
    %c4 = arith.constant 4 : index
    %c0_13 = arith.constant 0 : index
    %65 = vector.load %arg2[%c4, %c0_13] : memref<8x256xf32, #tpu.memory_space<vmem>>, vector<4x256xf32>
    %cst_14 = arith.constant 5.000000e-02 : f32
    %66 = vector.broadcast %cst_14 : f32 to vector<4x256xf32>
    %67 = arith.mulf %66, %61 : vector<4x256xf32>
    %cst_15 = arith.constant 0.000000e+00 : f32
    %68 = vector.broadcast %cst_15 : f32 to vector<4x256xf32>
    %69 = arith.addf %68, %67 : vector<4x256xf32>
    %70 = arith.addf %64, %69 : vector<4x256xf32>
    %c0_16 = arith.constant 0 : index
    %c0_17 = arith.constant 0 : index
    %71 = vector.load %arg3[%c0_16, %c0_17] : memref<8x256xf32, #tpu.memory_space<vmem>>, vector<4x256xf32>
    tpu.vector_store %arg3[%c0_16, %c0_17], %70 {strides = array<i32>} : memref<8x256xf32, #tpu.memory_space<vmem>>, vector<4x256xf32>,
    %cst_18 = arith.constant 5.000000e-02 : f32
    %72 = vector.broadcast %cst_18 : f32 to vector<4x256xf32>
    %73 = arith.mulf %72, %63 : vector<4x256xf32>
    %cst_19 = arith.constant 0.000000e+00 : f32
    %74 = vector.broadcast %cst_19 : f32 to vector<4x256xf32>
    %75 = arith.addf %74, %73 : vector<4x256xf32>
    %76 = arith.addf %65, %75 : vector<4x256xf32>
    %c4_20 = arith.constant 4 : index
    %c0_21 = arith.constant 0 : index
    %77 = vector.load %arg3[%c4_20, %c0_21] : memref<8x256xf32, #tpu.memory_space<vmem>>, vector<4x256xf32>
    tpu.vector_store %arg3[%c4_20, %c0_21], %76 {strides = array<i32>} : memref<8x256xf32, #tpu.memory_space<vmem>>, vector<4x256xf32>,
    return
  }
  func.func @transform_0(%arg0: i32, %arg1: memref<1xi32, #tpu.memory_space<smem>>) -> (i32, i32) {
    %c0_i32 = arith.constant 0 : i32
    %c0_i32_0 = arith.constant 0 : i32
    return %arg0, %c0_i32 : i32, i32
  }
  func.func @transform_1(%arg0: i32, %arg1: memref<1xi32, #tpu.memory_space<smem>>) -> (i32, i32) {
    %c0_i32 = arith.constant 0 : i32
    %c0_i32_0 = arith.constant 0 : i32
    return %arg0, %c0_i32 : i32, i32
  }
}

</mosaic_0001>

<llo_original>
// kernel: tpu_custom_call.1
$region0: #{tpu_custom_call.1}
  #allocation0 [shape = 'u32[]', space=smem, size = 0x4, offset = 0x4, fixed_abs, tag = 'smem constant byte address 0x4 - core index']
  #allocation1 [shape = 'u32[144,128]{1,0:T(1,128)}', space=vmem, size = 0x12000, scoped, tag = 'internal scratch']
  #allocation2 [shape = 's32[1]{0}', space=sflag, size = 0x4, scoped, tag = 'scoped memory for tpu_custom_call.1']
  #allocation3 [shape = 's32[1]{0:T(128)S(6)}', space=smem, size = 0x200, scoped, tag = 'prefetched SMEM operand 0']
  %s0 = inlined_call_operand.<no memory space> [shape: s32[1], index: 0, kind: input, shape index: {}]
  %s1 = inlined_call_operand.hbm [shape: f32[8,256], index: 1, kind: input, shape index: {}]
  %s2 = inlined_call_operand.hbm [shape: f32[8,256], index: 2, kind: output, shape index: {}]
  %s3 = sld [smem:[#allocation0]]
  $region18: #{tpu_custom_call.1} parent=0
    _
  %s5 = ssub.s32 1, %s3
  %s6 = scalar_select 0, %s5, %s3
  %7 = sst [smem:[#allocation3]] %s0
  $region1: #{tpu_custom_call.1} parent=0
    #allocation4 [shape = 'u8[8192]{0}', space=vmem, size = 0x2000, scoped, tag = 'input window, operand 1, single buffered']
    #allocation5 [shape = 's32[1]{0}', space=sflag, size = 0x4, scoped, tag = 'scoped memory for tpu_custom_call.1']
    #allocation6 [shape = 's32[1]{0}', space=sflag, size = 0x4, scoped, tag = 'scoped memory for tpu_custom_call.1']
    #allocation7 [shape = 'u8[8192]{0}', space=vmem, size = 0x2000, scoped, tag = 'output window, operand 0, single buffered']
    %8 = vsyncpa [#allocation5], 0
    %9 = vsyncpa [#allocation6], 0
    // Predicated region
    $region2: #{tpu_custom_call.1} parent=1 // pred_check
      _
    $region3: #{tpu_custom_call.1} parent=1 // pred_check_branch
      %11 = sbr.rel (0) target = $region5
    $region4: #{tpu_custom_call.1} parent=1 // pred_region
      %s13 = ssub.s32 256, 256
      %14 = vsyncadd [#allocation5], %s13
      %s16 = sshll.u32 [#allocation4], 4
      %s17 = int_to_ptr.vmem [resolvable:$true] %s16
      %19 = dma.hbm_to_vmem [thread:$0]  %s1, 256, %s17, [#allocation5]
    $region5: #{tpu_custom_call.1} parent=1 // pred_fallthru
      _
    // Predicated region
    $region6: #{tpu_custom_call.1} parent=1 // pred_check
      _
    $region7: #{tpu_custom_call.1} parent=1 // pred_check_branch
      %21 = sbr.rel (0) target = $region9
    $region8: #{tpu_custom_call.1} parent=1 // pred_region
      %22 = dma.done [#allocation5], 256
    $region9: #{tpu_custom_call.1} parent=1 // pred_fallthru
      _
    %s23 = smul.u32 0, 8
    %v24 = vlaneseq
    %v25 = vshrl.u32 %v24, 7
    %v26 = vlaneseq
    %v27 = vand.u32 %v26, 127
    %v28 = vadd.s32 %v27, 128
    %v29 = vstv %s23
    %v30 = vadd.s32 %v29, %v25
    %v31 = vmul.u32 %v30, 256
    %v32 = vadd.s32 %v31, %v27
    %v33 = vadd.s32 %v31, %v28
    %s34 = sld [smem:[#allocation3]]
    %s35 = smul.u32 %s34, 2654435769
    %v36 = vstv %s35
    %v37 = vadd.s32 %v32, %v36
    %v38 = vadd.s32 %v33, %v36
    %v39 = vshrl.u32 %v37, 16
    %v40 = vshrl.u32 %v38, 16
    %v41 = vxor.u32 %v37, %v39
    %v42 = vxor.u32 %v38, %v40
    %v43 = vmul.u32 %v41, 569420461
    %v44 = vmul.u32 %v42, 569420461
    %v45 = vshrl.u32 %v43, 15
    %v46 = vshrl.u32 %v44, 15
    %v47 = vxor.u32 %v43, %v45
    %v48 = vxor.u32 %v44, %v46
    %v49 = vmul.u32 %v47, 1935289751
    %v50 = vmul.u32 %v48, 1935289751
    %v51 = vshrl.u32 %v49, 15
    %v52 = vshrl.u32 %v50, 15
    %v53 = vxor.u32 %v49, %v51
    %v54 = vxor.u32 %v50, %v52
    %v55 = vadd.s32 %v53, 1779033703
    %v56 = vadd.s32 %v54, 1779033703
    %v57 = vshrl.u32 %v55, 16
    %v58 = vshrl.u32 %v56, 16
    %v59 = vxor.u32 %v55, %v57
    %v60 = vxor.u32 %v56, %v58
    %v61 = vmul.u32 %v59, 569420461
    %v62 = vmul.u32 %v60, 569420461
    %v63 = vshrl.u32 %v61, 15
    %v64 = vshrl.u32 %v62, 15
    %v65 = vxor.u32 %v61, %v63
    %v66 = vxor.u32 %v62, %v64
    %v67 = vmul.u32 %v65, 1935289751
    %v68 = vmul.u32 %v66, 1935289751
    %v69 = vshrl.u32 %v67, 15
    %v70 = vshrl.u32 %v68, 15
    %v71 = vxor.u32 %v67, %v69
    %v72 = vxor.u32 %v68, %v70
    %v73 = vshrl.u32 %v53, 9
    %v74 = vshrl.u32 %v54, 9
    %v75 = vor.u32 %v73, 1065353216
    %v76 = vor.u32 %v74, 1065353216
    %v79 = vshrl.u32 %v71, 9
    %v80 = vshrl.u32 %v72, 9
    %v81 = vor.u32 %v79, 1065353216
    %v82 = vor.u32 %v80, 1065353216
    %v85 = vsub.f32 %v81, 1.0
    %v86 = vsub.f32 %v82, 1.0
    %v87 = vsub.f32 2.0, %v75
    %v88 = vsub.f32 2.0, %v76
    %v89 = vlog2.pop %v87
    %v90 = vmul.f32 %v89, 0.6931472
    %v91 = vlog2.pop %v88
    %v92 = vmul.f32 %v91, 0.6931472
    %v93 = vmul.f32 %v90, -2.0
    %v94 = vmul.f32 %v92, -2.0
    %v95 = vrsqrt.pop %v93
    %v96 = vmul.f32 %v93, %v95
    %vm97 = vcmp.eq.f32.partialorder %v93, inf
    %v98 = vsel %vm97, %v93, %v96
    %vm99 = vcmp.eq.f32.partialorder %v93, 0.0
    %v100 = vand.u32 %v93, 2147483648
    %v101 = vsel %vm99, %v100, %v98
    %v102 = vrsqrt.pop %v94
    %v103 = vmul.f32 %v94, %v102
    %vm104 = vcmp.eq.f32.partialorder %v94, inf
    %v105 = vsel %vm104, %v94, %v103
    %vm106 = vcmp.eq.f32.partialorder %v94, 0.0
    %v107 = vand.u32 %v94, 2147483648
    %v108 = vsel %vm106, %v107, %v105
    %v109 = vmul.f32 %v85, 6.2831855
    %v110 = vmul.f32 %v86, 6.2831855
    %v111 = vand.u32 2147483647, %v109
    %vm112 = vcmp.le.f32.partialorder %v111, 0.7853982
    %vm113 = vcmp.lt.s32.totalorder %v109, 0
    %v114 = vand.u32 %v109, 2139095040
    %v115 = vshrl.u32 %v114, 23
    %v116 = vsub.s32 %v115, 127
    %v117 = vand.u32 2147483647, %v109
    %v118 = vand.u32 %v117, 8388607
    %v119 = vor.u32 %v118, 8388608
    %v120 = vsub.s32 0, %v119
    %v121 = vadd.s32 %v116, 1
    %vm122 = vcmp.gt.s32.totalorder %v121, 0
    %v123 = vsel %vm122, %v121, 0
    %v124 = vshrl.u32 %v123, 5
    %v125 = vand.u32 %v123, 31
    %v126 = vsub.s32 32, %v125
    %v127 = vshrl.u32 683565275, %v126
    %v128 = vshll.u32 683565275, %v125
    %v129 = vshrl.u32 2475754826, %v126
    %v130 = vor.u32 %v128, %v129
    %v131 = vshll.u32 2475754826, %v125
    %v132 = vshrl.u32 2131351028, %v126
    %v133 = vor.u32 %v131, %v132
    %v134 = vshll.u32 2131351028, %v125
    %v135 = vshrl.u32 2102212464, %v126
    %v136 = vor.u32 %v134, %v135
    %v137 = vshll.u32 2102212464, %v125
    %v138 = vshrl.u32 920167782, %v126
    %v139 = vor.u32 %v137, %v138
    %v140 = vshll.u32 920167782, %v125
    %v141 = vshrl.u32 1326507024, %v126
    %v142 = vor.u32 %v140, %v141
    %vm143 = vcmp.lt.s32.totalorder %v124, 1
    %vm144 = vcmp.lt.s32.totalorder %v124, 2
    %vm145 = vcmp.lt.s32.totalorder %v124, 3
    %vm146 = vcmp.lt.s32.totalorder %v124, 4
    %v147 = vsel %vm143, %v127, %v130
    %v148 = vsel %vm146, %v136, 2102212464
    %v149 = vsel %vm145, %v133, %v148
    %v150 = vsel %vm144, %v147, %v149
    %v151 = vsel %vm143, %v130, %v133
    %v152 = vsel %vm146, %v139, 920167782
    %v153 = vsel %vm145, %v136, %v152
    %v154 = vsel %vm144, %v151, %v153
    %v155 = vsel %vm143, %v133, %v136
    %v156 = vsel %vm146, %v142, 1326507024
    %v157 = vsel %vm145, %v139, %v156
    %v158 = vsel %vm144, %v155, %v157
    %v159 = vshll.u32 %v119, 8
    %v160 = vmul.u32.u64.compose %v159, %v158
    %v161 = vextract.low.u32 %v160
    %v162 = vextract.high.u32 %v160
    %v163 = vmul.u32.u64.compose %v159, %v154
    %v164 = vextract.low.u32 %v163
    %v165 = vextract.high.u32 %v163
    %v166 = vmul.u32 %v159, %v150
    %v167 = vadd.s32 %v162, %v164
    %vm168 = vc.u32 %v162, %v164
    %v169 = vadd.s32 %v165, 1
    %v170 = vsel %vm168, %v169, %v165
    %v171 = vadd.s32 %v166, %v170
    %v172 = vadd.s32 %v171, 536870912
    %v173 = vshrl.u32 %v172, 30
    %v174 = vshll.u32 %v173, 30
    %v175 = vsub.s32 %v171, %v174
    %vm176 = vcmp.lt.s32.totalorder %v175, 0
    %v177 = vsub.s32 0, %v175
    %v178 = vsel %vm176, %v177, %v175
    %v179 = vclz %v178
    %v180 = vsub.s32 %v179, 2
    %vm181 = vcmp.gt.s32.totalorder 0, %v180
    %v182 = vsel %vm181, 0, %v180
    %v183 = vsub.s32 32, %v182
    %v184 = vshll.u32 %v175, %v182
    %v185 = vshrl.u32 %v167, %v183
    %v186 = vor.u32 %v184, %v185
    %v187 = vsub.s32 4294967266, %v182
    %v188 = vadd.s32 %v187, 127
    %v189 = vshll.u32 %v188, 23
    %v190 = vor.u32 4788187, %v189
    %v191 = vand.u32 2147483647, %v190
    %v193 = vcvt.s32.f32 %v186
    %v194 = vmul.f32 %v193, %v191
    %v195 = vxor.u32 %v194, 2147483648
    %v196 = vsel %vm113, %v195, %v194
    %v197 = vsub.s32 4, %v173
    %v198 = vsel %vm113, %v197, %v173
    %v199 = vsel %vm112, %v109, %v196
    %v200 = vsel %vm112, 0, %v198
    %v201 = vcosq.f32.pop %v199
    %v202 = vsinq.f32.pop %v199
    %vm203 = vweird.f32 %v109
    %v204 = vand.u32 %v200, 3
    %vm205 = vcmp.lt.s32.totalorder %v204, 2
    %vm206 = vcmp.eq.s32.totalorder %v204, 0
    %v207 = vxor.u32 %v202, 2147483648
    %v208 = vsel %vm206, %v201, %v207
    %vm209 = vcmp.eq.s32.totalorder %v204, 2
    %v210 = vxor.u32 %v201, 2147483648
    %v211 = vsel %vm209, %v210, %v202
    %v212 = vsel %vm205, %v208, %v211
    %v213 = vsel %vm203, nan, %v212
    %v214 = vand.u32 2147483647, %v110
    %vm215 = vcmp.le.f32.partialorder %v214, 0.7853982
    %vm216 = vcmp.lt.s32.totalorder %v110, 0
    %v217 = vand.u32 %v110, 2139095040
    %v218 = vshrl.u32 %v217, 23
    %v219 = vsub.s32 %v218, 127
    %v220 = vand.u32 2147483647, %v110
    %v221 = vand.u32 %v220, 8388607
    %v222 = vor.u32 %v221, 8388608
    %v223 = vsub.s32 0, %v222
    %v224 = vadd.s32 %v219, 1
    %vm225 = vcmp.gt.s32.totalorder %v224, 0
    %v226 = vsel %vm225, %v224, 0
    %v227 = vshrl.u32 %v226, 5
    %v228 = vand.u32 %v226, 31
    %v229 = vsub.s32 32, %v228
    %v230 = vshrl.u32 683565275, %v229
    %v231 = vshll.u32 683565275, %v228
    %v232 = vshrl.u32 2475754826, %v229
    %v233 = vor.u32 %v231, %v232
    %v234 = vshll.u32 2475754826, %v228
    %v235 = vshrl.u32 2131351028, %v229
    %v236 = vor.u32 %v234, %v235
    %v237 = vshll.u32 2131351028, %v228
    %v238 = vshrl.u32 2102212464, %v229
    %v239 = vor.u32 %v237, %v238
    %v240 = vshll.u32 2102212464, %v228
    %v241 = vshrl.u32 920167782, %v229
    %v242 = vor.u32 %v240, %v241
    %v243 = vshll.u32 920167782, %v228
    %v244 = vshrl.u32 1326507024, %v229
    %v245 = vor.u32 %v243, %v244
    %vm246 = vcmp.lt.s32.totalorder %v227, 1
    %vm247 = vcmp.lt.s32.totalorder %v227, 2
    %vm248 = vcmp.lt.s32.totalorder %v227, 3
    %vm249 = vcmp.lt.s32.totalorder %v227, 4
    %v250 = vsel %vm246, %v230, %v233
    %v251 = vsel %vm249, %v239, 2102212464
    %v252 = vsel %vm248, %v236, %v251
    %v253 = vsel %vm247, %v250, %v252
    %v254 = vsel %vm246, %v233, %v236
    %v255 = vsel %vm249, %v242, 920167782
    %v256 = vsel %vm248, %v239, %v255
    %v257 = vsel %vm247, %v254, %v256
    %v258 = vsel %vm246, %v236, %v239
    %v259 = vsel %vm249, %v245, 1326507024
    %v260 = vsel %vm248, %v242, %v259
    %v261 = vsel %vm247, %v258, %v260
    %v262 = vshll.u32 %v222, 8
    %v263 = vmul.u32.u64.compose %v262, %v261
    %v264 = vextract.low.u32 %v263
    %v265 = vextract.high.u32 %v263
    %v266 = vmul.u32.u64.compose %v262, %v257
    %v267 = vextract.low.u32 %v266
    %v268 = vextract.high.u32 %v266
    %v269 = vmul.u32 %v262, %v253
    %v270 = vadd.s32 %v265, %v267
    %vm271 = vc.u32 %v265, %v267
    %v272 = vadd.s32 %v268, 1
    %v273 = vsel %vm271, %v272, %v268
    %v274 = vadd.s32 %v269, %v273
    %v275 = vadd.s32 %v274, 536870912
    %v276 = vshrl.u32 %v275, 30
    %v277 = vshll.u32 %v276, 30
    %v278 = vsub.s32 %v274, %v277
    %vm279 = vcmp.lt.s32.totalorder %v278, 0
    %v280 = vsub.s32 0, %v278
    %v281 = vsel %vm279, %v280, %v278
    %v282 = vclz %v281
    %v283 = vsub.s32 %v282, 2
    %vm284 = vcmp.gt.s32.totalorder 0, %v283
    %v285 = vsel %vm284, 0, %v283
    %v286 = vsub.s32 32, %v285
    %v287 = vshll.u32 %v278, %v285
    %v288 = vshrl.u32 %v270, %v286
    %v289 = vor.u32 %v287, %v288
    %v290 = vsub.s32 4294967266, %v285
    %v291 = vadd.s32 %v290, 127
    %v292 = vshll.u32 %v291, 23
    %v293 = vor.u32 4788187, %v292
    %v294 = vand.u32 2147483647, %v293
    %v296 = vcvt.s32.f32 %v289
    %v297 = vmul.f32 %v296, %v294
    %v298 = vxor.u32 %v297, 2147483648
    %v299 = vsel %vm216, %v298, %v297
    %v300 = vsub.s32 4, %v276
    %v301 = vsel %vm216, %v300, %v276
    %v302 = vsel %vm215, %v110, %v299
    %v303 = vsel %vm215, 0, %v301
    %v304 = vcosq.f32.pop %v302
    %v305 = vsinq.f32.pop %v302
    %vm306 = vweird.f32 %v110
    %v307 = vand.u32 %v303, 3
    %vm308 = vcmp.lt.s32.totalorder %v307, 2
    %vm309 = vcmp.eq.s32.totalorder %v307, 0
    %v310 = vxor.u32 %v305, 2147483648
    %v311 = vsel %vm309, %v304, %v310
    %vm312 = vcmp.eq.s32.totalorder %v307, 2
    %v313 = vxor.u32 %v304, 2147483648
    %v314 = vsel %vm312, %v313, %v305
    %v315 = vsel %vm308, %v311, %v314
    %v316 = vsel %vm306, nan, %v315
    %v317 = vmul.f32 %v101, %v213
    %v318 = vmul.f32 %v108, %v316
    %v319 = vand.u32 2147483647, %v109
    %vm320 = vcmp.le.f32.partialorder %v319, 0.7853982
    %vm321 = vcmp.lt.s32.totalorder %v109, 0
    %v322 = vand.u32 %v109, 2139095040
    %v323 = vshrl.u32 %v322, 23
    %v324 = vsub.s32 %v323, 127
    %v325 = vand.u32 2147483647, %v109
    %v326 = vand.u32 %v325, 8388607
    %v327 = vor.u32 %v326, 8388608
    %v328 = vsub.s32 0, %v327
    %v329 = vadd.s32 %v324, 1
    %vm330 = vcmp.gt.s32.totalorder %v329, 0
    %v331 = vsel %vm330, %v329, 0
    %v332 = vshrl.u32 %v331, 5
    %v333 = vand.u32 %v331, 31
    %v334 = vsub.s32 32, %v333
    %v335 = vshrl.u32 683565275, %v334
    %v336 = vshll.u32 683565275, %v333
    %v337 = vshrl.u32 2475754826, %v334
    %v338 = vor.u32 %v336, %v337
    %v339 = vshll.u32 2475754826, %v333
    %v340 = vshrl.u32 2131351028, %v334
    %v341 = vor.u32 %v339, %v340
    %v342 = vshll.u32 2131351028, %v333
    %v343 = vshrl.u32 2102212464, %v334
    %v344 = vor.u32 %v342, %v343
    %v345 = vshll.u32 2102212464, %v333
    %v346 = vshrl.u32 920167782, %v334
    %v347 = vor.u32 %v345, %v346
    %v348 = vshll.u32 920167782, %v333
    %v349 = vshrl.u32 1326507024, %v334
    %v350 = vor.u32 %v348, %v349
    %vm351 = vcmp.lt.s32.totalorder %v332, 1
    %vm352 = vcmp.lt.s32.totalorder %v332, 2
    %vm353 = vcmp.lt.s32.totalorder %v332, 3
    %vm354 = vcmp.lt.s32.totalorder %v332, 4
    %v355 = vsel %vm351, %v335, %v338
    %v356 = vsel %vm354, %v344, 2102212464
    %v357 = vsel %vm353, %v341, %v356
    %v358 = vsel %vm352, %v355, %v357
    %v359 = vsel %vm351, %v338, %v341
    %v360 = vsel %vm354, %v347, 920167782
    %v361 = vsel %vm353, %v344, %v360
    %v362 = vsel %vm352, %v359, %v361
    %v363 = vsel %vm351, %v341, %v344
    %v364 = vsel %vm354, %v350, 1326507024
    %v365 = vsel %vm353, %v347, %v364
    %v366 = vsel %vm352, %v363, %v365
    %v367 = vshll.u32 %v327, 8
    %v368 = vmul.u32.u64.compose %v367, %v366
    %v369 = vextract.low.u32 %v368
    %v370 = vextract.high.u32 %v368
    %v371 = vmul.u32.u64.compose %v367, %v362
    %v372 = vextract.low.u32 %v371
    %v373 = vextract.high.u32 %v371
    %v374 = vmul.u32 %v367, %v358
    %v375 = vadd.s32 %v370, %v372
    %vm376 = vc.u32 %v370, %v372
    %v377 = vadd.s32 %v373, 1
    %v378 = vsel %vm376, %v377, %v373
    %v379 = vadd.s32 %v374, %v378
    %v380 = vadd.s32 %v379, 536870912
    %v381 = vshrl.u32 %v380, 30
    %v382 = vshll.u32 %v381, 30
    %v383 = vsub.s32 %v379, %v382
    %vm384 = vcmp.lt.s32.totalorder %v383, 0
    %v385 = vsub.s32 0, %v383
    %v386 = vsel %vm384, %v385, %v383
    %v387 = vclz %v386
    %v388 = vsub.s32 %v387, 2
    %vm389 = vcmp.gt.s32.totalorder 0, %v388
    %v390 = vsel %vm389, 0, %v388
    %v391 = vsub.s32 32, %v390
    %v392 = vshll.u32 %v383, %v390
    %v393 = vshrl.u32 %v375, %v391
    %v394 = vor.u32 %v392, %v393
    %v395 = vsub.s32 4294967266, %v390
    %v396 = vadd.s32 %v395, 127
    %v397 = vshll.u32 %v396, 23
    %v398 = vor.u32 4788187, %v397
    %v399 = vand.u32 2147483647, %v398
    %v401 = vcvt.s32.f32 %v394
    %v402 = vmul.f32 %v401, %v399
    %v403 = vxor.u32 %v402, 2147483648
    %v404 = vsel %vm321, %v403, %v402
    %v405 = vsub.s32 4, %v381
    %v406 = vsel %vm321, %v405, %v381
    %v407 = vsel %vm320, %v109, %v404
    %v408 = vsel %vm320, 0, %v406
    %v409 = vcosq.f32.pop %v407
    %v410 = vsinq.f32.pop %v407
    %vm411 = vweird.f32 %v109
    %v412 = vadd.s32 %v408, 3
    %v413 = vand.u32 %v412, 3
    %vm414 = vcmp.lt.s32.totalorder %v413, 2
    %vm415 = vcmp.eq.s32.totalorder %v413, 0
    %v416 = vxor.u32 %v410, 2147483648
    %v417 = vsel %vm415, %v409, %v416
    %vm418 = vcmp.eq.s32.totalorder %v413, 2
    %v419 = vxor.u32 %v409, 2147483648
    %v420 = vsel %vm418, %v419, %v410
    %v421 = vsel %vm414, %v417, %v420
    %v422 = vsel %vm411, nan, %v421
    %v423 = vand.u32 2147483647, %v110
    %vm424 = vcmp.le.f32.partialorder %v423, 0.7853982
    %vm425 = vcmp.lt.s32.totalorder %v110, 0
    %v426 = vand.u32 %v110, 2139095040
    %v427 = vshrl.u32 %v426, 23
    %v428 = vsub.s32 %v427, 127
    %v429 = vand.u32 2147483647, %v110
    %v430 = vand.u32 %v429, 8388607
    %v431 = vor.u32 %v430, 8388608
    %v432 = vsub.s32 0, %v431
    %v433 = vadd.s32 %v428, 1
    %vm434 = vcmp.gt.s32.totalorder %v433, 0
    %v435 = vsel %vm434, %v433, 0
    %v436 = vshrl.u32 %v435, 5
    %v437 = vand.u32 %v435, 31
    %v438 = vsub.s32 32, %v437
    %v439 = vshrl.u32 683565275, %v438
    %v440 = vshll.u32 683565275, %v437
    %v441 = vshrl.u32 2475754826, %v438
    %v442 = vor.u32 %v440, %v441
    %v443 = vshll.u32 2475754826, %v437
    %v444 = vshrl.u32 2131351028, %v438
    %v445 = vor.u32 %v443, %v444
    %v446 = vshll.u32 2131351028, %v437
    %v447 = vshrl.u32 2102212464, %v438
    %v448 = vor.u32 %v446, %v447
    %v449 = vshll.u32 2102212464, %v437
    %v450 = vshrl.u32 920167782, %v438
    %v451 = vor.u32 %v449, %v450
    %v452 = vshll.u32 920167782, %v437
    %v453 = vshrl.u32 1326507024, %v438
    %v454 = vor.u32 %v452, %v453
    %vm455 = vcmp.lt.s32.totalorder %v436, 1
    %vm456 = vcmp.lt.s32.totalorder %v436, 2
    %vm457 = vcmp.lt.s32.totalorder %v436, 3
    %vm458 = vcmp.lt.s32.totalorder %v436, 4
    %v459 = vsel %vm455, %v439, %v442
    %v460 = vsel %vm458, %v448, 2102212464
    %v461 = vsel %vm457, %v445, %v460
    %v462 = vsel %vm456, %v459, %v461
    %v463 = vsel %vm455, %v442, %v445
    %v464 = vsel %vm458, %v451, 920167782
    %v465 = vsel %vm457, %v448, %v464
    %v466 = vsel %vm456, %v463, %v465
    %v467 = vsel %vm455, %v445, %v448
    %v468 = vsel %vm458, %v454, 1326507024
    %v469 = vsel %vm457, %v451, %v468
    %v470 = vsel %vm456, %v467, %v469
    %v471 = vshll.u32 %v431, 8
    %v472 = vmul.u32.u64.compose %v471, %v470
    %v473 = vextract.low.u32 %v472
    %v474 = vextract.high.u32 %v472
    %v475 = vmul.u32.u64.compose %v471, %v466
    %v476 = vextract.low.u32 %v475
    %v477 = vextract.high.u32 %v475
    %v478 = vmul.u32 %v471, %v462
    %v479 = vadd.s32 %v474, %v476
    %vm480 = vc.u32 %v474, %v476
    %v481 = vadd.s32 %v477, 1
    %v482 = vsel %vm480, %v481, %v477
    %v483 = vadd.s32 %v478, %v482
    %v484 = vadd.s32 %v483, 536870912
    %v485 = vshrl.u32 %v484, 30
    %v486 = vshll.u32 %v485, 30
    %v487 = vsub.s32 %v483, %v486
    %vm488 = vcmp.lt.s32.totalorder %v487, 0
    %v489 = vsub.s32 0, %v487
    %v490 = vsel %vm488, %v489, %v487
    %v491 = vclz %v490
    %v492 = vsub.s32 %v491, 2
    %vm493 = vcmp.gt.s32.totalorder 0, %v492
    %v494 = vsel %vm493, 0, %v492
    %v495 = vsub.s32 32, %v494
    %v496 = vshll.u32 %v487, %v494
    %v497 = vshrl.u32 %v479, %v495
    %v498 = vor.u32 %v496, %v497
    %v499 = vsub.s32 4294967266, %v494
    %v500 = vadd.s32 %v499, 127
    %v501 = vshll.u32 %v500, 23
    %v502 = vor.u32 4788187, %v501
    %v503 = vand.u32 2147483647, %v502
    %v505 = vcvt.s32.f32 %v498
    %v506 = vmul.f32 %v505, %v503
    %v507 = vxor.u32 %v506, 2147483648
    %v508 = vsel %vm425, %v507, %v506
    %v509 = vsub.s32 4, %v485
    %v510 = vsel %vm425, %v509, %v485
    %v511 = vsel %vm424, %v110, %v508
    %v512 = vsel %vm424, 0, %v510
    %v513 = vcosq.f32.pop %v511
    %v514 = vsinq.f32.pop %v511
    %vm515 = vweird.f32 %v110
    %v516 = vadd.s32 %v512, 3
    %v517 = vand.u32 %v516, 3
    %vm518 = vcmp.lt.s32.totalorder %v517, 2
    %vm519 = vcmp.eq.s32.totalorder %v517, 0
    %v520 = vxor.u32 %v514, 2147483648
    %v521 = vsel %vm519, %v513, %v520
    %vm522 = vcmp.eq.s32.totalorder %v517, 2
    %v523 = vxor.u32 %v513, 2147483648
    %v524 = vsel %vm522, %v523, %v514
    %v525 = vsel %vm518, %v521, %v524
    %v526 = vsel %vm515, nan, %v525
    %v527 = vmul.f32 %v101, %v422
    %v528 = vmul.f32 %v108, %v526
    %v529 = vld [vmem:[#allocation4] sm:$0xf]
    %v530 = vld [vmem:[#allocation4 + $0x8] sm:$0xf]
    %v531 = vld [vmem:[#allocation4] sm:$0xf0]
    %v532 = vld [vmem:[#allocation4 + $0x8] sm:$0xf0]
    %v533 = vmul.f32 %v317, 0.05
    %v534 = vmul.f32 %v318, 0.05
    %v535 = vadd.f32 %v533, 0.0
    %v536 = vadd.f32 %v534, 0.0
    %v537 = vadd.f32 %v529, %v535
    %v538 = vadd.f32 %v530, %v536
    %539 = vst [vmem:[#allocation7] sm:$0xf] %v537
    %540 = vst [vmem:[#allocation7 + $0x8] sm:$0xf] %v538
    %v541 = vmul.f32 %v527, 0.05
    %v542 = vmul.f32 %v528, 0.05
    %v543 = vadd.f32 %v541, 0.0
    %v544 = vadd.f32 %v542, 0.0
    %v547 = vrot.slane %v543, 4
    %v548 = vrot.slane %v544, 4
    %v551 = vadd.f32 %v531, %v547
    %v552 = vadd.f32 %v532, %v548
    %553 = vst [vmem:[#allocation7] sm:$0xf0] %v551
    %554 = vst [vmem:[#allocation7 + $0x8] sm:$0xf0] %v552
    // Predicated region
    $region10: #{tpu_custom_call.1} parent=1 // pred_check
      _
    $region11: #{tpu_custom_call.1} parent=1 // pred_check_branch
      %556 = sbr.rel (0) target = $region13
    $region12: #{tpu_custom_call.1} parent=1 // pred_region
      %s558 = ssub.s32 256, 256
      %559 = vsyncadd [#allocation6], %s558
      %s561 = sshll.u32 [#allocation7], 4
      %s562 = int_to_ptr.vmem [resolvable:$true] %s561
      %564 = dma.vmem_to_hbm [thread:$0]  %s562, 256, %s2, [#allocation6]
    $region13: #{tpu_custom_call.1} parent=1 // pred_fallthru
      _
    // Predicated region
    $region14: #{tpu_custom_call.1} parent=1 // pred_check
      _
    $region15: #{tpu_custom_call.1} parent=1 // pred_check_branch
      %566 = sbr.rel (0) target = $region17
    $region16: #{tpu_custom_call.1} parent=1 // pred_region
      %567 = dma.done [#allocation6], 256
    $region17: #{tpu_custom_call.1} parent=1 // pred_fallthru
      _
    %568 = vsyncpa [#allocation5], 1
    %569 = vsyncpa [#allocation6], 1

</llo_original>
